<compile_context>
chip_gen: v6e
topology: v6e:2x2x1
jax: 0.10.0
libtpu: 0.0.40
codegen_flags: <defaults>
</compile_context>

<pallas_src>
import numpy as np
import jax
import jax.numpy as jnp
from jax.experimental import pallas as pl
from jax.experimental.pallas import tpu as pltpu

_LANE = 128
_SUBLANE = 8


def _round_up(x, m):
    return ((x + m - 1) // m) * m


def _sublane(dtype):
    # bf16 rows are packed in pairs along sublanes -> round batch tiles to 16.
    return 16 if jnp.dtype(dtype).itemsize == 2 else _SUBLANE


# ----------------------------------------------------------------------------
# Kernels
# ----------------------------------------------------------------------------
def siren_kernel(x_ref, wt_ref, b_ref, o_ref):
    # x_ref:  [TILE_B, in_f]     activation tile (streamed, K unpadded)
    # wt_ref: [in_f, out_pad]    w0*W^T, N padded to lane multiple (VMEM-resident)
    # b_ref:  [1, out_pad]       w0*b (VMEM-resident)
    # o_ref:  [TILE_B, out_pad]  lane-dense output tile
    x = x_ref[...].astype(wt_ref.dtype)
    acc = jnp.dot(x, wt_ref[...], preferred_element_type=jnp.float32)
    acc = acc + b_ref[...].astype(jnp.float32)
    o_ref[...] = jnp.sin(acc).astype(o_ref.dtype)


def siren_stack_kernel(x_ref, *refs):
    # refs = [w_0, b_0, w_1, b_1, ..., w_{L-1}, b_{L-1}, o_ref]
    # All params VMEM-resident; inter-layer activations never leave VMEM/vregs.
    # TODO(synk): for very deep stacks, switch the static unroll to a dynamic
    # in-kernel loop over a stacked [L, H_pad, H_pad] weight ref.
    o_ref = refs[-1]
    h = x_ref[...]
    for li in range(0, len(refs) - 1, 2):
        w_ref, b_ref = refs[li], refs[li + 1]
        acc = jnp.dot(h.astype(w_ref.dtype), w_ref[...],
                      preferred_element_type=jnp.float32)
        h = jnp.sin(acc + b_ref[...].astype(jnp.float32))
    o_ref[...] = h.astype(o_ref.dtype)


# ----------------------------------------------------------------------------
# One-time parameter prep (hoisted out of the per-call path)
# ----------------------------------------------------------------------------
def prepare_siren_params(weight, bias, w0=30.0, dtype=None, in_pad_to=None):
    """Fold w0 into the params, transpose W to [in_f(_pad), out_pad].

    K is left unpadded by default (full-extent block in the kernel), N is
    padded to a multiple of 128 for lane-dense MXU input / unmasked stores.
    `in_pad_to` zero-pads K (used when stacking so layer k's K matches layer
    k-1's padded output width). Do this ONCE at parameter load time.
    """
    out_f, in_f = weight.shape
    out_pad = _round_up(out_f, _LANE)
    in_pad = in_f if in_pad_to is None else int(in_pad_to)
    assert in_pad >= in_f

    wt = jnp.transpose(weight).astype(jnp.float32) * w0          # [in_f, out_f]
    wt = jnp.pad(wt, ((0, in_pad - in_f), (0, out_pad - out_f)))
    b = bias if bias is not None else jnp.zeros((out_f,), jnp.float32)
    b2 = jnp.pad(jnp.asarray(b, jnp.float32) * w0,
                 (0, out_pad - out_f)).reshape(1, out_pad)

    if dtype is None:
        dtype = weight.dtype
    return wt.astype(dtype), b2.astype(dtype), out_f


def prepare_siren_stack_params(layers, w0=30.0, dtype=None):
    """layers: list of (weight [out_f, in_f], bias [out_f] or None).

    Layer k>0's K is zero-padded to layer k-1's padded output width so the
    activation can stay padded (and VMEM-resident) through the fused stack.
    Padded activation columns are exactly sin(0)=0 and the padded weight rows
    are 0, so the padding is numerically inert.
    """
    prepared = []
    prev_pad = None
    prev_out = None
    out_f = None
    for (w, b) in layers:
        of, inf_ = w.shape
        if prev_out is not None:
            assert inf_ == prev_out, "layer widths must chain"
        wt, b2, out_f = prepare_siren_params(
            w, b, w0=w0, dtype=dtype,
            in_pad_to=(inf_ if prev_pad is None else prev_pad))
        prepared.append((wt, b2))
        prev_pad = wt.shape[1]
        prev_out = of
    return prepared, out_f


# ----------------------------------------------------------------------------
# Generation-aware VMEM budget / tile sizing
# ----------------------------------------------------------------------------
def _tpu_budget():
    """(tile budget bytes, tile_b cap, vmem_limit cap) by VMEM capacity."""
    try:
        vmem = pltpu.get_tpu_info().vmem_capacity_bytes
    except Exception:
        vmem = 64 << 20                       # assume the smallest (v7x per-TC)
    if vmem >= (100 << 20):                   # v5e / v6e: 128 MiB
        return 48 << 20, 4096, 64 << 20
    return 24 << 20, 2048, 40 << 20           # v7x: 64 MiB/TC, both TCs hold W/b


def _vmem_bytes(tile_b, in_f, out_pad, act_bytes, out_bytes, w_bytes):
    in_lanes = _round_up(in_f, _LANE)         # VMEM lane tiling of the x buffer
    return (2 * tile_b * in_lanes * act_bytes          # double-buffered x tiles
            + 2 * tile_b * out_pad * out_bytes          # double-buffered out tiles
            + (_round_up(in_f, _SUBLANE) * out_pad      # resident W (single buf)
               + _SUBLANE * out_pad) * w_bytes)         # resident b (single buf)


def _choose_tile_b(B, in_f, out_pad, act_dtype, out_dtype, w_dtype,
                   budget_bytes, tile_cap):
    ab = jnp.dtype(act_dtype).itemsize
    ob = jnp.dtype(out_dtype).itemsize
    wb = jnp.dtype(w_dtype).itemsize
    packing = max(_sublane(act_dtype), _sublane(out_dtype))
    in_lanes = _round_up(in_f, _LANE)
    fixed = (_round_up(in_f, _SUBLANE) * out_pad + _SUBLANE * out_pad) * wb
    per_row = 2 * (in_lanes * ab + out_pad * ob)
    tile = max((budget_bytes - fixed) // max(per_row, 1), packing)
    tile = (tile // packing) * packing
    tile = min(tile, tile_cap, _round_up(B, packing))
    return int(max(tile, packing))


# ----------------------------------------------------------------------------
# Single SirenBlock forward
# ----------------------------------------------------------------------------
def siren_block(x, wt, b2, out_features, *, out_dtype=None,
                slice_output=True, tile_b=None):
    """x: [B, in_f]; (wt, b2) from prepare_siren_params (w0 already folded in).

    Set slice_output=False when stacking blocks manually so the padded
    activation flows into the next layer without an extra HBM slice pass.
    """
    B, in_f = x.shape
    kin, out_pad = wt.shape
    assert kin == in_f
    out_dtype = jnp.dtype(out_dtype or x.dtype)

    budget, tile_cap, vmem_cap = _tpu_budget()
    if tile_b is None:
        tile_b = _choose_tile_b(B, in_f, out_pad, x.dtype, out_dtype, wt.dtype,
                                budget, tile_cap)
    packing = max(_sublane(x.dtype), _sublane(out_dtype))
    assert tile_b % packing == 0

    grid = (pl.cdiv(B, tile_b),)              # ragged last tile -> masked stores

    act_b = jnp.dtype(x.dtype).itemsize
    out_b = out_dtype.itemsize
    w_b = jnp.dtype(wt.dtype).itemsize
    vmem_need = _vmem_bytes(tile_b, in_f, out_pad, act_b, out_b, w_b)
    vmem_limit = int(min(vmem_need + (8 << 20), vmem_cap))

    cost = pl.CostEstimate(
        flops=2 * B * in_f * out_pad,
        transcendentals=B * out_pad,
        bytes_accessed=(B * in_f * act_b + wt.size * w_b + b2.size * w_b
                        + B * out_pad * out_b),
    )

    out = pl.pallas_call(
        siren_kernel,
        out_shape=jax.ShapeDtypeStruct((B, out_pad), out_dtype),
        grid_spec=pltpu.PrefetchScalarGridSpec(
            num_scalar_prefetch=0,
            grid=grid,
            in_specs=[
                pl.BlockSpec((tile_b, in_f), lambda i: (i, 0)),   # streamed x, K unpadded
                pl.BlockSpec((in_f, out_pad), lambda i: (0, 0)),  # resident weight
                pl.BlockSpec((1, out_pad), lambda i: (0, 0)),     # resident bias
            ],
            out_specs=pl.BlockSpec((tile_b, out_pad), lambda i: (i, 0)),
        ),
        compiler_params=pltpu.CompilerParams(
            dimension_semantics=("parallel",),
            vmem_limit_bytes=vmem_limit,
        ),
        cost_estimate=cost,
    )(x, wt, b2)

    if slice_output and out_features != out_pad:
        return out[:, :out_features]
    return out


# ----------------------------------------------------------------------------
# Fused stack of SirenBlocks (one pallas_call; activations stay in VMEM)
# ----------------------------------------------------------------------------
def siren_stack(x, prepared, out_features, *, out_dtype=None,
                slice_output=True, tile_b=None):
    """prepared: list of (wt, b2) from prepare_siren_stack_params."""
    B, in_f = x.shape
    assert prepared[0][0].shape[0] == in_f
    out_dtype = jnp.dtype(out_dtype or x.dtype)
    out_pad = prepared[-1][0].shape[1]

    budget, tile_cap, vmem_cap = _tpu_budget()
    ab = jnp.dtype(x.dtype).itemsize
    ob = out_dtype.itemsize
    packing = max(_sublane(x.dtype), _sublane(out_dtype))
    widest = max(w.shape[1] for (w, _) in prepared)
    resident = sum(
        _round_up(w.shape[0], _SUBLANE) * w.shape[1] * w.dtype.itemsize
        + _SUBLANE * b.shape[1] * b.dtype.itemsize
        for (w, b) in prepared)
    per_row = (2 * _round_up(in_f, _LANE) * ab + 2 * out_pad * ob
               + len(prepared) * widest * 4)            # f32 inter-layer temps
    if tile_b is None:
        tile_b = max((budget - resident) // max(per_row, 1), packing)
        tile_b = (tile_b // packing) * packing
        tile_b = int(min(tile_b, tile_cap, _round_up(B, packing)))
        tile_b = max(tile_b, packing)
    assert tile_b % packing == 0

    grid = (pl.cdiv(B, tile_b),)
    vmem_limit = int(min(resident + tile_b * per_row + (8 << 20), vmem_cap))

    in_specs = [pl.BlockSpec((tile_b, in_f), lambda i: (i, 0))]
    flat_params = []
    for (w, b) in prepared:
        in_specs.append(pl.BlockSpec(w.shape, lambda i: (0, 0)))  # resident
        in_specs.append(pl.BlockSpec(b.shape, lambda i: (0, 0)))  # resident
        flat_params.extend((w, b))

    out = pl.pallas_call(
        siren_stack_kernel,
        out_shape=jax.ShapeDtypeStruct((B, out_pad), out_dtype),
        grid_spec=pltpu.PrefetchScalarGridSpec(
            num_scalar_prefetch=0,
            grid=grid,
            in_specs=in_specs,
            out_specs=pl.BlockSpec((tile_b, out_pad), lambda i: (i, 0)),
        ),
        compiler_params=pltpu.CompilerParams(
            dimension_semantics=("parallel",),
            vmem_limit_bytes=vmem_limit,
        ),
    )(x, *flat_params)

    if slice_output and out_features != out_pad:
        return out[:, :out_features]
    return out


# ----------------------------------------------------------------------------
# SIREN init matching SirenBlock.init
# ----------------------------------------------------------------------------
def make_siren_params(key, in_features, out_features, w0=30.0, c=6.0,
                      is_first=False, dtype=jnp.float32):
    n = in_features
    w_std = (1.0 / n) if is_first else (np.sqrt(c / n) / w0)
    kw, kb = jax.random.split(key)
    weight = jax.random.uniform(kw, (out_features, in_features),
                                minval=-w_std, maxval=w_std, dtype=dtype)
    bias = jax.random.uniform(kb, (out_features,),
                              minval=-w_std, maxval=w_std, dtype=dtype)
    return weight, bias


if __name__ == "__main__":
    key = jax.random.PRNGKey(0)
    k1, k2, k3, kx = jax.random.split(key, 4)

    w0 = 30.0
    B = 50                               # ragged batch (not a tile multiple)
    in_features, hidden, out_features = 8, 32, 32   # small coordinate-style layer

    x = jax.random.normal(kx, (B, in_features), dtype=jnp.float32)

    # ---- single SirenBlock (is_first coordinate layer), f32 ----
    w1, b1 = make_siren_params(k1, in_features, hidden, w0=w0, is_first=True)
    wt1, bb1, _ = prepare_siren_params(w1, b1, w0=w0)           # one-time prep
    y = siren_block(x, wt1, bb1, hidden, tile_b=16)             # multi-step ragged grid
    y = jax.block_until_ready(y)
    ref1 = jnp.sin(w0 * (x @ w1.T + b1))
    np.testing.assert_allclose(np.asarray(y), np.asarray(ref1),
                               rtol=1e-4, atol=1e-4)

    # ---- fused 3-layer SIREN stack: activations never touch HBM ----
    w2, b2 = make_siren_params(k2, hidden, hidden, w0=w0)
    w3, b3 = make_siren_params(k3, hidden, out_features, w0=w0)
    prepared, last_out_f = prepare_siren_stack_params(
        [(w1, b1), (w2, b2), (w3, b3)], w0=w0)
    ys = jax.block_until_ready(siren_stack(x, prepared, last_out_f))
    h = jnp.sin(w0 * (x @ w1.T + b1))
    h = jnp.sin(w0 * (h @ w2.T + b2))
    ref_s = jnp.sin(w0 * (h @ w3.T + b3))
    np.testing.assert_allclose(np.asarray(ys), np.asarray(ref_s),
                               rtol=5e-4, atol=5e-4)

    # ---- bf16 weight/activation streams (f32 MXU accumulation) ----
    wt1b, bb1b, _ = prepare_siren_params(w1, b1, w0=w0, dtype=jnp.bfloat16)
    xb = x.astype(jnp.bfloat16)
    yb = jax.block_until_ready(siren_block(xb, wt1b, bb1b, hidden))
    ref_b = jnp.sin(xb.astype(jnp.float32) @ wt1b[:, :hidden].astype(jnp.float32)
                    + bb1b[0, :hidden].astype(jnp.float32))
    np.testing.assert_allclose(np.asarray(yb).astype(np.float32),
                               np.asarray(ref_b), rtol=2e-2, atol=2e-2)

    print("KERNEL_OK")
</pallas_src>

<mosaic_0001>
module attributes {stable_mosaic.version = 11 : i64} {
  func.func @siren_kernel(%arg0: i32, %arg1: memref<16x8xf32, #tpu.memory_space<vmem>>, %arg2: memref<8x128xf32, #tpu.memory_space<vmem>>, %arg3: memref<1x128xf32, #tpu.memory_space<vmem>>, %arg4: memref<16x128xf32, #tpu.memory_space<vmem>>) attributes {dimension_semantics = [#tpu.dimension_semantics<parallel>], iteration_bounds = array<i64: 4>, scalar_prefetch = 0 : i64, scratch_operands = 0 : i64, tpu.core_type = #tpu.core_type<tc>, window_params = [{transform_indices = @transform_0, window_bounds = array<i64: 16, 8>}, {pipeline_mode = #tpu.pipeline_mode<synchronous>, transform_indices = @transform_1, window_bounds = array<i64: 8, 128>}, {pipeline_mode = #tpu.pipeline_mode<synchronous>, transform_indices = @transform_2, window_bounds = array<i64: 1, 128>}, {transform_indices = @transform_3, window_bounds = array<i64: 16, 128>}]} {
    %c0 = arith.constant 0 : index
    %c0_0 = arith.constant 0 : index
    %0 = vector.load %arg1[%c0, %c0_0] : memref<16x8xf32, #tpu.memory_space<vmem>>, vector<16x8xf32>
    %c0_1 = arith.constant 0 : index
    %c0_2 = arith.constant 0 : index
    %1 = vector.load %arg2[%c0_1, %c0_2] : memref<8x128xf32, #tpu.memory_space<vmem>>, vector<8x128xf32>
    %cst = arith.constant dense<0.000000e+00> : vector<16x128xf32>
    %2 = tpu.matmul %0, %1, %cst {dimension_numbers = #tpu.dot_dimension_numbers<[1], [0], [0], [1], [0, 0, 1, 1], [], []>} : vector<16x8xf32>, vector<8x128xf32>, vector<16x128xf32> -> vector<16x128xf32>
    %c0_3 = arith.constant 0 : index
    %c0_4 = arith.constant 0 : index
    %3 = vector.load %arg3[%c0_3, %c0_4] : memref<1x128xf32, #tpu.memory_space<vmem>>, vector<1x128xf32>
    %4 = vector.broadcast %3 : vector<1x128xf32> to vector<16x128xf32>
    %5 = arith.addf %2, %4 : vector<16x128xf32>
    %6 = math.sin %5 : vector<16x128xf32>
    %c0_5 = arith.constant 0 : index
    %c0_6 = arith.constant 0 : index
    %7 = vector.load %arg4[%c0_5, %c0_6] : memref<16x128xf32, #tpu.memory_space<vmem>>, vector<16x128xf32>
    tpu.vector_store %arg4[%c0_5, %c0_6], %6 {strides = array<i32>} : memref<16x128xf32, #tpu.memory_space<vmem>>, vector<16x128xf32>,
    return
  }
  func.func @transform_0(%arg0: i32) -> (i32, i32) {
    %c0_i32 = arith.constant 0 : i32
    %c0_i32_0 = arith.constant 0 : i32
    return %arg0, %c0_i32 : i32, i32
  }
  func.func @transform_1(%arg0: i32) -> (i32, i32) {
    %c0_i32 = arith.constant 0 : i32
    %c0_i32_0 = arith.constant 0 : i32
    %c0_i32_1 = arith.constant 0 : i32
    return %c0_i32, %c0_i32_0 : i32, i32
  }
  func.func @transform_2(%arg0: i32) -> (i32, i32) {
    %c0_i32 = arith.constant 0 : i32
    %c0_i32_0 = arith.constant 0 : i32
    %c0_i32_1 = arith.constant 0 : i32
    return %c0_i32, %c0_i32_0 : i32, i32
  }
  func.func @transform_3(%arg0: i32) -> (i32, i32) {
    %c0_i32 = arith.constant 0 : i32
    %c0_i32_0 = arith.constant 0 : i32
    return %arg0, %c0_i32 : i32, i32
  }
}

</mosaic_0001>

<llo_original>
// kernel: tpu_custom_call.1
$region0: #{tpu_custom_call.1}
  #allocation0 [shape = 'u32[]', space=smem, size = 0x4, offset = 0x4, fixed_abs, tag = 'smem constant byte address 0x4 - core index']
  #allocation1 [shape = 'u32[144,128]{1,0:T(1,128)}', space=vmem, size = 0x12000, scoped, tag = 'internal scratch']
  %s0 = inlined_call_operand.vmem [shape: f32[50,8], index: 0, kind: input, shape index: {}]
  %s1 = inlined_call_operand.vmem [shape: f32[8,128], index: 1, kind: input, shape index: {}]
  %s2 = inlined_call_operand.vmem [shape: f32[1,128], index: 2, kind: input, shape index: {}]
  %s3 = inlined_call_operand.hbm [shape: f32[50,128], index: 3, kind: output, shape index: {}]
  %s4 = sld [smem:[#allocation0]]
  $region45: #{tpu_custom_call.1} parent=0
    _
  %s6 = ssub.s32 1, %s4
  %s7 = scalar_select 0, %s6, %s4
  $region1: #{tpu_custom_call.1} parent=0
    #allocation2 [shape = 'u8[16384]{0}', space=vmem, size = 0x4000, scoped, tag = 'output window, operand 0']
    #allocation3 [shape = 's32[2]{0}', space=sflag, size = 0x8, scoped, tag = 'scoped memory for tpu_custom_call.1']
    %8 = vsyncpa [#allocation3], 0
    %s9 = scalar_lea.sflag [#allocation3], 1
    %10 = vsyncpa %s9, 0
    loop: start=0, step=1, limit=6
    $region2: #{tpu_custom_call.1} parent=1 // loop_pre_header
      _
    $region3: #{tpu_custom_call.1} parent=1 // loop_header
      %s12 = sphi 0, %s16
      %p13 = scmp.ge.s32.totalorder %s12, 6
      %s22 = sphi 0, %s24
      %s25 = sphi 0, %s22
      %s26 = sphi 0, %s25
      %s42 = sphi 0, %s26
      %s46 = sphi 0, %s46
      %s48 = sphi 0, %s46
      %s49 = sphi 0, %s48
      %s63 = sphi 0, %s49
      %s67 = sphi 0, %s67
      %s69 = sphi 0, %s67
      %s70 = sphi 0, %s69
      %s84 = sphi 0, %s70
      %s90 = sphi 0, %s92
      %s93 = sphi 0, %s90
      %s94 = sphi 0, %s93
      %s110 = sphi 0, %s94
    $region4: #{tpu_custom_call.1} parent=1 // loop_header_branch
      %15 = sbr.rel (%p13) target = $region8
    $region5: #{tpu_custom_call.1} parent=1 // loop_body
      %s17 = ssub.s32 %s12, 1
      %s18 = ssub.s32 %s12, 2
      %s19 = sadd.s32 %s12, 1
      %s20 = ssub.s32 %s12, %s19
      %p21 = scmp.eq.s32.totalorder %s20, 0
      %s23 = sadd.s32 %s22, 1
      %s24 = scalar_select %p21, %s22, %s23
      %p27 = pneg %p21
      %p28 = scmp.eq.s32.totalorder %s12, 3
      %p29 = por %p27, %p28
      %p30 = scmp.ne.s32.totalorder %s22, %s25
      %p31 = scmp.eq.s32.totalorder %s12, 0
      %p32 = por %p30, %p31
      %p33 = scmp.ne.s32.totalorder %s22, %s25
      %p34 = scmp.eq.s32.totalorder %s17, 3
      %p35 = por %p33, %p34
      %p36 = scmp.ne.s32.totalorder %s25, %s26
      %p37 = scmp.eq.s32.totalorder %s17, 0
      %p38 = por %p36, %p37
      %p39 = scmp.ne.s32.totalorder %s25, %s26
      %p40 = scmp.eq.s32.totalorder %s18, 3
      %p41 = por %p39, %p40
      %p43 = scmp.ne.s32.totalorder %s26, %s42
      %p44 = scmp.eq.s32.totalorder %s18, 0
      %p45 = por %p43, %p44
      %s47 = sadd.s32 %s46, 1
      %p50 = scmp.eq.s32.totalorder %s12, 3
      %p51 = scmp.ne.s32.totalorder %s46, %s48
      %p52 = scmp.eq.s32.totalorder %s12, 0
      %p53 = por %p51, %p52
      %p54 = scmp.ne.s32.totalorder %s46, %s48
      %p55 = scmp.eq.s32.totalorder %s17, 3
      %p56 = por %p54, %p55
      %p57 = scmp.ne.s32.totalorder %s48, %s49
      %p58 = scmp.eq.s32.totalorder %s17, 0
      %p59 = por %p57, %p58
      %p60 = scmp.ne.s32.totalorder %s48, %s49
      %p61 = scmp.eq.s32.totalorder %s18, 3
      %p62 = por %p60, %p61
      %p64 = scmp.ne.s32.totalorder %s49, %s63
      %p65 = scmp.eq.s32.totalorder %s18, 0
      %p66 = por %p64, %p65
      %s68 = sadd.s32 %s67, 1
      %p71 = scmp.eq.s32.totalorder %s12, 3
      %p72 = scmp.ne.s32.totalorder %s67, %s69
      %p73 = scmp.eq.s32.totalorder %s12, 0
      %p74 = por %p72, %p73
      %p75 = scmp.ne.s32.totalorder %s67, %s69
      %p76 = scmp.eq.s32.totalorder %s17, 3
      %p77 = por %p75, %p76
      %p78 = scmp.ne.s32.totalorder %s69, %s70
      %p79 = scmp.eq.s32.totalorder %s17, 0
      %p80 = por %p78, %p79
      %p81 = scmp.ne.s32.totalorder %s69, %s70
      %p82 = scmp.eq.s32.totalorder %s18, 3
      %p83 = por %p81, %p82
      %p85 = scmp.ne.s32.totalorder %s70, %s84
      %p86 = scmp.eq.s32.totalorder %s18, 0
      %p87 = por %p85, %p86
      %s88 = ssub.s32 %s12, %s19
      %p89 = scmp.eq.s32.totalorder %s88, 0
      %s91 = sadd.s32 %s90, 1
      %s92 = scalar_select %p89, %s90, %s91
      %p95 = pneg %p89
      %p96 = scmp.eq.s32.totalorder %s12, 3
      %p97 = por %p95, %p96
      %p98 = scmp.ne.s32.totalorder %s90, %s93
      %p99 = scmp.eq.s32.totalorder %s12, 0
      %p100 = por %p98, %p99
      %p101 = scmp.ne.s32.totalorder %s90, %s93
      %p102 = scmp.eq.s32.totalorder %s17, 3
      %p103 = por %p101, %p102
      %p104 = scmp.ne.s32.totalorder %s93, %s94
      %p105 = scmp.eq.s32.totalorder %s17, 0
      %p106 = por %p104, %p105
      %p107 = scmp.ne.s32.totalorder %s93, %s94
      %p108 = scmp.eq.s32.totalorder %s18, 3
      %p109 = por %p107, %p108
      %p111 = scmp.ne.s32.totalorder %s94, %s110
      %p112 = scmp.eq.s32.totalorder %s18, 0
      %p113 = por %p111, %p112
      %p114 = scmp.le.s32.totalorder 1, %s12
      %p115 = scmp.lt.s32.totalorder %s12, 5
      %p116 = pnand %p114, %p115
      %p117 = pneg %p116
      // Predicated region
      $region9: #{tpu_custom_call.1} parent=5 // pred_check
        _
      $region10: #{tpu_custom_call.1} parent=5 // pred_check_branch
        %119 = sbr.rel (%p116) target = $region12
      $region11: #{tpu_custom_call.1} parent=5 // pred_region
        %s120 = ssub.s32 %s12, 1
        // Predicated region
        $region13: #{tpu_custom_call.1} parent=11 // pred_check
          %p121 = pneg %p59
        $region14: #{tpu_custom_call.1} parent=11 // pred_check_branch
          %123 = sbr.rel (%p121) target = $region16
        $region15: #{tpu_custom_call.1} parent=11 // pred_region
          _
        $region16: #{tpu_custom_call.1} parent=11 // pred_fallthru
          _
        // Predicated region
        $region17: #{tpu_custom_call.1} parent=11 // pred_check
          %p124 = pneg %p80
        $region18: #{tpu_custom_call.1} parent=11 // pred_check_branch
          %126 = sbr.rel (%p124) target = $region20
        $region19: #{tpu_custom_call.1} parent=11 // pred_region
          _
        $region20: #{tpu_custom_call.1} parent=11 // pred_fallthru
          _
      $region12: #{tpu_custom_call.1} parent=5 // pred_fallthru
        _
      %p127 = scmp.lt.s32.totalorder %s12, 4
      // Predicated region
      $region21: #{tpu_custom_call.1} parent=5 // pred_check
        %p128 = pneg %p127
      $region22: #{tpu_custom_call.1} parent=5 // pred_check_branch
        %130 = sbr.rel (%p128) target = $region24
      $region23: #{tpu_custom_call.1} parent=5 // pred_region
        // Predicated region
        $region25: #{tpu_custom_call.1} parent=23 // pred_check
          %p131 = pneg %p32
        $region26: #{tpu_custom_call.1} parent=23 // pred_check_branch
          %133 = sbr.rel (%p131) target = $region28
        $region27: #{tpu_custom_call.1} parent=23 // pred_region
          %s134 = smul.u32 2, %s12
          %s135 = ssub.s32 7, %s134
          %p136 = scmp.lt.s32.totalorder %s135, 2
          %s137 = scalar_select %p136, %s135, 2
          %s138 = smul.u32 128, %s137
          %p139 = scmp.lt.s32.totalorder %s134, 6
          %s140 = scalar_select %p139, %s134, 6
          %s141 = smul.addr %s140, 8
          %s142 = scalar_lea.vmem %s0, %s141
          %s143 = smul.u32 2, %s12
          %s144 = ssub.s32 7, %s143
          %p145 = scmp.lt.s32.totalorder %s144, 2
          %s146 = scalar_select %p145, %s144, 2
          %s147 = smul.u32 128, %s146
        $region28: #{tpu_custom_call.1} parent=23 // pred_fallthru
          _
      $region24: #{tpu_custom_call.1} parent=5 // pred_fallthru
        _
      %p148 = scmp.le.s32.totalorder 1, %s12
      %p149 = scmp.lt.s32.totalorder %s12, 5
      %p150 = pnand %p148, %p149
      %p151 = pneg %p150
      // Predicated region
      $region29: #{tpu_custom_call.1} parent=5 // pred_check
        _
      $region30: #{tpu_custom_call.1} parent=5 // pred_check_branch
        %153 = sbr.rel (%p150) target = $region32
      $region31: #{tpu_custom_call.1} parent=5 // pred_region
        %s154 = ssub.s32 %s12, 1
        %s155 = smul.u32 2, %s17
        %s156 = ssub.s32 7, %s155
        %p157 = scmp.lt.s32.totalorder %s156, 2
        %s158 = scalar_select %p157, %s156, 2
        %s159 = smul.u32 128, %s158
        %p160 = scmp.lt.s32.totalorder %s155, 6
        %s161 = scalar_select %p160, %s155, 6
        %s162 = smul.addr %s161, 8
        %s163 = scalar_lea.vmem %s0, %s162
        %p164 = pneg %p38
        %p165 = pneg %p35
        %p166 = pneg %p59
        %p167 = pneg %p56
        %p168 = pneg %p80
        %p169 = pneg %p77
        %p170 = pneg %p106
        %p171 = pneg %p103
        %s172 = sand.u32 %s93, 1
        %s173 = scalar_lea.sflag [#allocation3], %s172
        %s174 = sand.u32 %s93, 1
        %s175 = smul.addr %s174, 16
        %s176 = scalar_lea.vmem [#allocation2], %s175
        %s177 = smul.u32 2, %s17
        %s178 = ssub.s32 7, %s177
        %p179 = scmp.lt.s32.totalorder %s178, 2
        %s180 = scalar_select %p179, %s178, 2
        %s181 = smul.u32 128, %s180
        %p182 = scmp.lt.s32.totalorder %s177, 6
        %s183 = scalar_select %p182, %s177, 6
        %s184 = smul.addr %s183, 8
        %s185 = scalar_lea.vmem %s0, %s184
        %s186 = smul.u32 2, %s17
        %s187 = ssub.s32 7, %s186
        %p188 = scmp.lt.s32.totalorder %s187, 2
        %s189 = scalar_select %p188, %s187, 2
        %s190 = smul.u32 128, %s189
        %s191 = smul.u32 2, %s17
        %s192 = ssub.s32 7, %s191
        %p193 = scmp.lt.s32.totalorder %s192, 2
        %s194 = scalar_select %p193, %s192, 2
        %s195 = smul.u32 128, %s194
        %v196 = vld [vmem:[%s185] sm:$0xff]
        %v197 = vld [vmem:[%s185 + $0x8] sm:$0xff]
        %v198 = vld [vmem:[%s1] sm:$0xff]
        %v199 = vld [vmem:[%s2] sm:$0x1]
        %v201 = vlaneseq
        %v202 = vshrl.u32 %v201, 7
        %v203 = vsub.s32 0, %v202
        %v204 = vrot.slane %v199, %v203
        %vm206 = vcmask 64512
        %v208 = vsel %vm206, %v196, 0
        %v211 = vsel %vm206, %v197, 0
        %213 = vmatprep.subr.mxu0 0.0
        %214 = vmatpush1.msra.mxu0 0.0
        %215 = vmatprep.subr.mxu0 0.0
        %216 = vmatpush1.msra.mxu0 0.0
        %217 = vmatprep.subr.mxu0 0.0
        %218 = vmatpush1.msra.mxu0 0.0
        %219 = vmatprep.subr.mxu0 0.0
        %220 = vmatpush1.msra.mxu0 0.0
        %221 = vmatprep.subr.mxu0 0.0
        %222 = vmatpush1.msra.mxu0 0.0
        %223 = vmatprep.subr.mxu0 0.0
        %224 = vmatpush1.msra.mxu0 0.0
        %225 = vmatprep.subr.mxu0 0.0
        %226 = vmatpush1.msra.mxu0 0.0
        %227 = vmatprep.subr.mxu0 0.0
        %228 = vmatpush1.msra.mxu0 0.0
        %229 = vmatprep.subr.mxu0 0.0
        %230 = vmatpush1.msra.mxu0 0.0
        %231 = vmatprep.subr.mxu0 0.0
        %232 = vmatpush1.msra.mxu0 0.0
        %233 = vmatprep.subr.mxu0 0.0
        %234 = vmatpush1.msra.mxu0 0.0
        %235 = vmatprep.subr.mxu0 0.0
        %236 = vmatpush1.msra.mxu0 0.0
        %237 = vmatprep.subr.mxu0 0.0
        %238 = vmatpush1.msra.mxu0 0.0
        %239 = vmatprep.subr.mxu0 0.0
        %240 = vmatpush1.msra.mxu0 0.0
        %241 = vmatprep.subr.mxu0 0.0
        %242 = vmatpush1.msra.mxu0 0.0
        %243 = vmatprep.subr.mxu0 0.0
        %244 = vmatpush1.msra.mxu0 %v198
        %245 = vmatprep.subr.mxu0 0.0
        %246 = vmatpush2.msra.mxu0 0.0
        %247 = vmatprep.subr.mxu0 0.0
        %248 = vmatpush2.msra.mxu0 0.0
        %249 = vmatprep.subr.mxu0 0.0
        %250 = vmatpush2.msra.mxu0 0.0
        %251 = vmatprep.subr.mxu0 0.0
        %252 = vmatpush2.msra.mxu0 0.0
        %253 = vmatprep.subr.mxu0 0.0
        %254 = vmatpush2.msra.mxu0 0.0
        %255 = vmatprep.subr.mxu0 0.0
        %256 = vmatpush2.msra.mxu0 0.0
        %257 = vmatprep.subr.mxu0 0.0
        %258 = vmatpush2.msra.mxu0 0.0
        %259 = vmatprep.subr.mxu0 0.0
        %260 = vmatpush2.msra.mxu0 0.0
        %261 = vmatprep.subr.mxu0 0.0
        %262 = vmatpush2.msra.mxu0 0.0
        %263 = vmatprep.subr.mxu0 0.0
        %264 = vmatpush2.msra.mxu0 0.0
        %265 = vmatprep.subr.mxu0 0.0
        %266 = vmatpush2.msra.mxu0 0.0
        %267 = vmatprep.subr.mxu0 0.0
        %268 = vmatpush2.msra.mxu0 0.0
        %269 = vmatprep.subr.mxu0 0.0
        %270 = vmatpush2.msra.mxu0 0.0
        %271 = vmatprep.subr.mxu0 0.0
        %272 = vmatpush2.msra.mxu0 0.0
        %273 = vmatprep.subr.mxu0 0.0
        %274 = vmatpush2.msra.mxu0 0.0
        %275 = vmatprep.subr.mxu0 0.0
        %276 = vmatpush2.msra.mxu0 0.0
        %277 = vmatprep.mubr.f32.mxu0 0.0
        %278 = vmatmul.mubr.f32.gmra.mxu0 %v208
        %v279 = vpop.f32.mrf.mxu0
        %v280 = vadd.f32 %v204, %v279
        %v281 = vpop.f32.mrf.mxu0
        %282 = vmatprep.mubr.f32.mxu0 0.0
        %283 = vmatmul.mubr.f32.gmra.mxu0 %v211
        %v284 = vpop.f32.mrf.mxu0
        %v285 = vadd.f32 %v204, %v284
        %v286 = vpop.f32.mrf.mxu0
        %287 = vdwg.mxu0
        %v288 = vand.u32 2147483647, %v280
        %vm289 = vcmp.le.f32.partialorder %v288, 0.7853982
        %vm290 = vcmp.lt.s32.totalorder %v280, 0
        %v291 = vand.u32 %v280, 2139095040
        %v292 = vshrl.u32 %v291, 23
        %v293 = vsub.s32 %v292, 127
        %v294 = vand.u32 2147483647, %v280
        %v295 = vand.u32 %v294, 8388607
        %v296 = vor.u32 %v295, 8388608
        %v297 = vsub.s32 0, %v296
        %v298 = vadd.s32 %v293, 1
        %vm299 = vcmp.gt.s32.totalorder %v298, 0
        %v300 = vsel %vm299, %v298, 0
        %v301 = vshrl.u32 %v300, 5
        %v302 = vand.u32 %v300, 31
        %v303 = vsub.s32 32, %v302
        %v304 = vshrl.u32 683565275, %v303
        %v305 = vshll.u32 683565275, %v302
        %v306 = vshrl.u32 2475754826, %v303
        %v307 = vor.u32 %v305, %v306
        %v308 = vshll.u32 2475754826, %v302
        %v309 = vshrl.u32 2131351028, %v303
        %v310 = vor.u32 %v308, %v309
        %v311 = vshll.u32 2131351028, %v302
        %v312 = vshrl.u32 2102212464, %v303
        %v313 = vor.u32 %v311, %v312
        %v314 = vshll.u32 2102212464, %v302
        %v315 = vshrl.u32 920167782, %v303
        %v316 = vor.u32 %v314, %v315
        %v317 = vshll.u32 920167782, %v302
        %v318 = vshrl.u32 1326507024, %v303
        %v319 = vor.u32 %v317, %v318
        %vm320 = vcmp.lt.s32.totalorder %v301, 1
        %vm321 = vcmp.lt.s32.totalorder %v301, 2
        %vm322 = vcmp.lt.s32.totalorder %v301, 3
        %vm323 = vcmp.lt.s32.totalorder %v301, 4
        %v324 = vsel %vm320, %v304, %v307
        %v325 = vsel %vm323, %v313, 2102212464
        %v326 = vsel %vm322, %v310, %v325
        %v327 = vsel %vm321, %v324, %v326
        %v328 = vsel %vm320, %v307, %v310
        %v329 = vsel %vm323, %v316, 920167782
        %v330 = vsel %vm322, %v313, %v329
        %v331 = vsel %vm321, %v328, %v330
        %v332 = vsel %vm320, %v310, %v313
        %v333 = vsel %vm323, %v319, 1326507024
        %v334 = vsel %vm322, %v316, %v333
        %v335 = vsel %vm321, %v332, %v334
        %v336 = vshll.u32 %v296, 8
        %v337 = vmul.u32.u64.compose %v336, %v335
        %v338 = vextract.low.u32 %v337
        %v339 = vextract.high.u32 %v337
        %v340 = vmul.u32.u64.compose %v336, %v331
        %v341 = vextract.low.u32 %v340
        %v342 = vextract.high.u32 %v340
        %v343 = vmul.u32 %v336, %v327
        %v344 = vadd.s32 %v339, %v341
        %vm345 = vc.u32 %v339, %v341
        %v346 = vadd.s32 %v342, 1
        %v347 = vsel %vm345, %v346, %v342
        %v348 = vadd.s32 %v343, %v347
        %v349 = vadd.s32 %v348, 536870912
        %v350 = vshrl.u32 %v349, 30
        %v351 = vshll.u32 %v350, 30
        %v352 = vsub.s32 %v348, %v351
        %vm353 = vcmp.lt.s32.totalorder %v352, 0
        %v354 = vsub.s32 0, %v352
        %v355 = vsel %vm353, %v354, %v352
        %v356 = vclz %v355
        %v357 = vsub.s32 %v356, 2
        %vm358 = vcmp.gt.s32.totalorder 0, %v357
        %v359 = vsel %vm358, 0, %v357
        %v360 = vsub.s32 32, %v359
        %v361 = vshll.u32 %v352, %v359
        %v362 = vshrl.u32 %v344, %v360
        %v363 = vor.u32 %v361, %v362
        %v364 = vsub.s32 4294967266, %v359
        %v365 = vadd.s32 %v364, 127
        %v366 = vshll.u32 %v365, 23
        %v367 = vor.u32 4788187, %v366
        %v368 = vand.u32 2147483647, %v367
        %v370 = vcvt.s32.f32 %v363
        %v371 = vmul.f32 %v370, %v368
        %v372 = vxor.u32 %v371, 2147483648
        %v373 = vsel %vm290, %v372, %v371
        %v374 = vsub.s32 4, %v350
        %v375 = vsel %vm290, %v374, %v350
        %v376 = vsel %vm289, %v280, %v373
        %v377 = vsel %vm289, 0, %v375
        %v378 = vcosq.f32.pop %v376
        %v379 = vsinq.f32.pop %v376
        %vm380 = vweird.f32 %v280
        %v381 = vadd.s32 %v377, 3
        %v382 = vand.u32 %v381, 3
        %vm383 = vcmp.lt.s32.totalorder %v382, 2
        %vm384 = vcmp.eq.s32.totalorder %v382, 0
        %v385 = vxor.u32 %v379, 2147483648
        %v386 = vsel %vm384, %v378, %v385
        %vm387 = vcmp.eq.s32.totalorder %v382, 2
        %v388 = vxor.u32 %v378, 2147483648
        %v389 = vsel %vm387, %v388, %v379
        %v390 = vsel %vm383, %v386, %v389
        %v391 = vsel %vm380, nan, %v390
        %v392 = vand.u32 2147483647, %v285
        %vm393 = vcmp.le.f32.partialorder %v392, 0.7853982
        %vm394 = vcmp.lt.s32.totalorder %v285, 0
        %v395 = vand.u32 %v285, 2139095040
        %v396 = vshrl.u32 %v395, 23
        %v397 = vsub.s32 %v396, 127
        %v398 = vand.u32 2147483647, %v285
        %v399 = vand.u32 %v398, 8388607
        %v400 = vor.u32 %v399, 8388608
        %v401 = vsub.s32 0, %v400
        %v402 = vadd.s32 %v397, 1
        %vm403 = vcmp.gt.s32.totalorder %v402, 0
        %v404 = vsel %vm403, %v402, 0
        %v405 = vshrl.u32 %v404, 5
        %v406 = vand.u32 %v404, 31
        %v407 = vsub.s32 32, %v406
        %v408 = vshrl.u32 683565275, %v407
        %v409 = vshll.u32 683565275, %v406
        %v410 = vshrl.u32 2475754826, %v407
        %v411 = vor.u32 %v409, %v410
        %v412 = vshll.u32 2475754826, %v406
        %v413 = vshrl.u32 2131351028, %v407
        %v414 = vor.u32 %v412, %v413
        %v415 = vshll.u32 2131351028, %v406
        %v416 = vshrl.u32 2102212464, %v407
        %v417 = vor.u32 %v415, %v416
        %v418 = vshll.u32 2102212464, %v406
        %v419 = vshrl.u32 920167782, %v407
        %v420 = vor.u32 %v418, %v419
        %v421 = vshll.u32 920167782, %v406
        %v422 = vshrl.u32 1326507024, %v407
        %v423 = vor.u32 %v421, %v422
        %vm424 = vcmp.lt.s32.totalorder %v405, 1
        %vm425 = vcmp.lt.s32.totalorder %v405, 2
        %vm426 = vcmp.lt.s32.totalorder %v405, 3
        %vm427 = vcmp.lt.s32.totalorder %v405, 4
        %v428 = vsel %vm424, %v408, %v411
        %v429 = vsel %vm427, %v417, 2102212464
        %v430 = vsel %vm426, %v414, %v429
        %v431 = vsel %vm425, %v428, %v430
        %v432 = vsel %vm424, %v411, %v414
        %v433 = vsel %vm427, %v420, 920167782
        %v434 = vsel %vm426, %v417, %v433
        %v435 = vsel %vm425, %v432, %v434
        %v436 = vsel %vm424, %v414, %v417
        %v437 = vsel %vm427, %v423, 1326507024
        %v438 = vsel %vm426, %v420, %v437
        %v439 = vsel %vm425, %v436, %v438
        %v440 = vshll.u32 %v400, 8
        %v441 = vmul.u32.u64.compose %v440, %v439
        %v442 = vextract.low.u32 %v441
        %v443 = vextract.high.u32 %v441
        %v444 = vmul.u32.u64.compose %v440, %v435
        %v445 = vextract.low.u32 %v444
        %v446 = vextract.high.u32 %v444
        %v447 = vmul.u32 %v440, %v431
        %v448 = vadd.s32 %v443, %v445
        %vm449 = vc.u32 %v443, %v445
        %v450 = vadd.s32 %v446, 1
        %v451 = vsel %vm449, %v450, %v446
        %v452 = vadd.s32 %v447, %v451
        %v453 = vadd.s32 %v452, 536870912
        %v454 = vshrl.u32 %v453, 30
        %v455 = vshll.u32 %v454, 30
        %v456 = vsub.s32 %v452, %v455
        %vm457 = vcmp.lt.s32.totalorder %v456, 0
        %v458 = vsub.s32 0, %v456
        %v459 = vsel %vm457, %v458, %v456
        %v460 = vclz %v459
        %v461 = vsub.s32 %v460, 2
        %vm462 = vcmp.gt.s32.totalorder 0, %v461
        %v463 = vsel %vm462, 0, %v461
        %v464 = vsub.s32 32, %v463
        %v465 = vshll.u32 %v456, %v463
        %v466 = vshrl.u32 %v448, %v464
        %v467 = vor.u32 %v465, %v466
        %v468 = vsub.s32 4294967266, %v463
        %v469 = vadd.s32 %v468, 127
        %v470 = vshll.u32 %v469, 23
        %v471 = vor.u32 4788187, %v470
        %v472 = vand.u32 2147483647, %v471
        %v474 = vcvt.s32.f32 %v467
        %v475 = vmul.f32 %v474, %v472
        %v476 = vxor.u32 %v475, 2147483648
        %v477 = vsel %vm394, %v476, %v475
        %v478 = vsub.s32 4, %v454
        %v479 = vsel %vm394, %v478, %v454
        %v480 = vsel %vm393, %v285, %v477
        %v481 = vsel %vm393, 0, %v479
        %v482 = vcosq.f32.pop %v480
        %v483 = vsinq.f32.pop %v480
        %vm484 = vweird.f32 %v285
        %v485 = vadd.s32 %v481, 3
        %v486 = vand.u32 %v485, 3
        %vm487 = vcmp.lt.s32.totalorder %v486, 2
        %vm488 = vcmp.eq.s32.totalorder %v486, 0
        %v489 = vxor.u32 %v483, 2147483648
        %v490 = vsel %vm488, %v482, %v489
        %vm491 = vcmp.eq.s32.totalorder %v486, 2
        %v492 = vxor.u32 %v482, 2147483648
        %v493 = vsel %vm491, %v492, %v483
        %v494 = vsel %vm487, %v490, %v493
        %v495 = vsel %vm484, nan, %v494
        %496 = vst [vmem:[%s176] sm:$0xff] %v391
        %497 = vst [vmem:[%s176 + $0x8] sm:$0xff] %v495
        %s498 = sand.u32 %s93, 1
        %s499 = scalar_lea.sflag [#allocation3], %s498
        %s500 = sand.u32 %s93, 1
        %s501 = smul.addr %s500, 16
        %s502 = scalar_lea.vmem [#allocation2], %s501
        // Predicated region
        $region33: #{tpu_custom_call.1} parent=31 // pred_check
          %p503 = pneg %p103
        $region34: #{tpu_custom_call.1} parent=31 // pred_check_branch
          %505 = sbr.rel (%p503) target = $region36
        $region35: #{tpu_custom_call.1} parent=31 // pred_region
          %s506 = smul.u32 2, %s17
          %s507 = ssub.s32 7, %s506
          %p508 = scmp.lt.s32.totalorder %s507, 2
          %s509 = scalar_select %p508, %s507, 2
          %s510 = smul.u32 128, %s509
          %s512 = ssub.s32 256, %s510
          %513 = vsyncadd %s499, %s512
          %p514 = scmp.ne.s32.totalorder 0, %s510
          %s515 = smul.addr %s506, 128
          %s516 = scalar_lea.hbm %s3, %s515
          %s517 = smul.u32 8, %s509
          %s518 = sshll.u32 %s502, 4
          %s519 = int_to_ptr.vmem [resolvable:$true] %s518
          %s520 = sshll.u32 %s517, 4
          %524 = dma.vmem_to_hbm [thread:$0]  (%p514), %s519, %s520, %s516, %s499, 128, 128, 8
        $region36: #{tpu_custom_call.1} parent=31 // pred_fallthru
          _
      $region32: #{tpu_custom_call.1} parent=5 // pred_fallthru
        _
      %p525 = scmp.le.s32.totalorder 2, %s12
      // Predicated region
      $region37: #{tpu_custom_call.1} parent=5 // pred_check
        %p526 = pneg %p525
      $region38: #{tpu_custom_call.1} parent=5 // pred_check_branch
        %528 = sbr.rel (%p526) target = $region40
      $region39: #{tpu_custom_call.1} parent=5 // pred_region
        %s529 = ssub.s32 %s12, 2
        // Predicated region
        $region41: #{tpu_custom_call.1} parent=39 // pred_check
          %p530 = pneg %p109
        $region42: #{tpu_custom_call.1} parent=39 // pred_check_branch
          %532 = sbr.rel (%p530) target = $region44
        $region43: #{tpu_custom_call.1} parent=39 // pred_region
          %s533 = sand.u32 %s94, 1
          %s534 = scalar_lea.sflag [#allocation3], %s533
          %s535 = sand.u32 %s94, 1
          %s536 = smul.addr %s535, 16
          %s537 = scalar_lea.vmem [#allocation2], %s536
          %538 = dma.done %s534, 256
        $region44: #{tpu_custom_call.1} parent=39 // pred_fallthru
          _
      $region40: #{tpu_custom_call.1} parent=5 // pred_fallthru
        _
    $region6: #{tpu_custom_call.1} parent=1 // loop_footer
      %s16 = sadd.s32 1, %s12
    $region7: #{tpu_custom_call.1} parent=1 // loop_footer_branch
      %11 = sbr.rel target = $region3
    $region8: #{tpu_custom_call.1} parent=1 // loop_exit
      _
    %539 = vsyncpa [#allocation3], 1
    %s540 = scalar_lea.sflag [#allocation3], 1
    %541 = vsyncpa %s540, 1

</llo_original>
